<compile_context>
chip_gen: v5e
topology: v5e:2x2
jax: 0.10.0
libtpu: 0.0.40
codegen_flags: <defaults>
</compile_context>

<pallas_src>
import jax
import jax.numpy as jnp
from jax.experimental import pallas as pl
from jax.experimental.pallas import tpu as pltpu


def _gamma_kernel(gamma_ref, x_ref, o_ref):
    # gamma_ref: SMEM (1,) f32 scalar; x_ref/o_ref: VMEM (tr, lanes) tiles.
    inv_g = 1.0 / gamma_ref[0]                 # scalar unit, effectively free
    xf = x_ref[...].astype(jnp.float32)        # compute pow in f32
    o_ref[...] = jnp.power(xf, inv_g).astype(o_ref.dtype)


def _round_up(x: int, m: int) -> int:
    return (x + m - 1) // m * m


def gamma_correct_forward(x: jax.Array, gamma) -> jax.Array:
    """Pallas implementation of GammaCorrect.forward: x ** (1 / gamma)."""
    orig_shape = x.shape
    n = x.size
    if n == 0:
        return x

    # Choose the widest lane dim that divides n (avoids a padded HBM copy).
    lanes = None
    for cand in (1024, 512, 256, 128):
        if n % cand == 0:
            lanes = cand
            break
    flat = x.reshape(-1)
    if lanes is None:
        # Rare fallback: pad only the small remainder up to one lane row.
        lanes = 128
        pad = (-n) % lanes
        flat = jnp.pad(flat, (0, pad), constant_values=1)
    x2d = flat.reshape(-1, lanes)
    rows = x2d.shape[0]

    # ~1 MiB (f32-equivalent) per input tile; conservative for v7x's smaller
    # VMEM and still large enough to sit near the HBM roofline everywhere.
    target_rows = _round_up(max(8, (1 << 20) // (lanes * 4)), 8)
    if rows <= target_rows:
        tr = rows                    # single block == full array extent
    else:
        tr = target_rows             # multiple of 8; ragged last block masked
    grid = (pl.cdiv(rows, tr),)

    gamma_arr = jnp.asarray(gamma, dtype=jnp.float32).reshape(1)

    out2d = pl.pallas_call(
        _gamma_kernel,
        out_shape=jax.ShapeDtypeStruct(x2d.shape, x.dtype),
        grid_spec=pltpu.PrefetchScalarGridSpec(
            num_scalar_prefetch=1,                       # gamma -> SMEM
            grid=grid,
            in_specs=[pl.BlockSpec((tr, lanes), lambda i, g: (i, 0))],
            out_specs=pl.BlockSpec((tr, lanes), lambda i, g: (i, 0)),
        ),
        compiler_params=pltpu.CompilerParams(
            dimension_semantics=("parallel",)),          # 2x TCs on v7x
        # pow(x, c) lowers to exp(c*log(x)) => 2 transcendentals / element.
        cost_estimate=pl.CostEstimate(
            flops=n,
            transcendentals=2 * n,
            bytes_accessed=2 * n * x.dtype.itemsize),
    )(gamma_arr, x2d)

    if out2d.size != n:
        return out2d.reshape(-1)[:n].reshape(orig_shape)
    return out2d.reshape(orig_shape)


if __name__ == "__main__":
    key = jax.random.PRNGKey(0)

    # Deterministic parameter init, matching the module's __init__ default.
    gamma = jnp.float32(2.2)

    # NCHW input, positive values (pow of negatives is NaN, same as torch.pow).
    x = jax.random.uniform(key, (2, 4, 16, 16), dtype=jnp.float32,
                           minval=0.01, maxval=1.0)

    y = gamma_correct_forward(x, gamma)
    y = jax.block_until_ready(y)

    # Sanity check against plain-JAX reference.
    y_ref = jnp.power(x, 1.0 / gamma)
    assert y.shape == x.shape
    assert jnp.allclose(y, y_ref, atol=1e-5, rtol=1e-5)

    print("KERNEL_OK")
</pallas_src>

<mosaic_0001>
module attributes {stable_mosaic.version = 11 : i64} {
  func.func @_gamma_kernel(%arg0: i32, %arg1: memref<1xf32, #tpu.memory_space<smem>>, %arg2: memref<2x1024xf32, #tpu.memory_space<vmem>>, %arg3: memref<2x1024xf32, #tpu.memory_space<vmem>>) attributes {dimension_semantics = [#tpu.dimension_semantics<parallel>], iteration_bounds = array<i64: 1>, scalar_prefetch = 1 : i64, scratch_operands = 0 : i64, tpu.core_type = #tpu.core_type<tc>, window_params = [{transform_indices = @transform_0, window_bounds = array<i64: 2, 1024>}, {transform_indices = @transform_1, window_bounds = array<i64: 2, 1024>}]} {
    %c0 = arith.constant 0 : index
    %0 = memref.load %arg1[%c0] : memref<1xf32, #tpu.memory_space<smem>>
    %cst = arith.constant 1.000000e+00 : f32
    %1 = arith.divf %cst, %0 : f32
    %c0_0 = arith.constant 0 : index
    %c0_1 = arith.constant 0 : index
    %2 = vector.load %arg2[%c0_0, %c0_1] : memref<2x1024xf32, #tpu.memory_space<vmem>>, vector<2x1024xf32>
    %3 = vector.broadcast %1 : f32 to vector<2x1024xf32>
    %4 = math.powf %2, %3 : vector<2x1024xf32>
    %c0_2 = arith.constant 0 : index
    %c0_3 = arith.constant 0 : index
    %5 = vector.load %arg3[%c0_2, %c0_3] : memref<2x1024xf32, #tpu.memory_space<vmem>>, vector<2x1024xf32>
    tpu.vector_store %arg3[%c0_2, %c0_3], %4 {strides = array<i32>} : memref<2x1024xf32, #tpu.memory_space<vmem>>, vector<2x1024xf32>,
    return
  }
  func.func @transform_0(%arg0: i32, %arg1: memref<1xf32, #tpu.memory_space<smem>>) -> (i32, i32) {
    %c0_i32 = arith.constant 0 : i32
    %c0_i32_0 = arith.constant 0 : i32
    return %arg0, %c0_i32 : i32, i32
  }
  func.func @transform_1(%arg0: i32, %arg1: memref<1xf32, #tpu.memory_space<smem>>) -> (i32, i32) {
    %c0_i32 = arith.constant 0 : i32
    %c0_i32_0 = arith.constant 0 : i32
    return %arg0, %c0_i32 : i32, i32
  }
}

</mosaic_0001>

<llo_original>
// kernel: tpu_custom_call.1
$region0: #{tpu_custom_call.1}
  #allocation0 [shape = 'u32[]', space=smem, size = 0x4, offset = 0x4, fixed_abs, tag = 'smem constant byte address 0x4 - core index']
  #allocation1 [shape = 'u32[72,128]{1,0:T(1,128)}', space=vmem, size = 0x9000, scoped, tag = 'internal scratch']
  #allocation2 [shape = 's32[1]{0}', space=sflag, size = 0x4, scoped, tag = 'scoped memory for tpu_custom_call.1']
  #allocation3 [shape = 'f32[1]{0:T(128)S(6)}', space=smem, size = 0x200, scoped, tag = 'prefetched SMEM operand 0']
  %s0 = inlined_call_operand.<no memory space> [shape: f32[1], index: 0, kind: input, shape index: {}]
  %s1 = inlined_call_operand.hbm [shape: f32[2,1024], index: 1, kind: input, shape index: {}]
  %s2 = inlined_call_operand.hbm [shape: f32[2,1024], index: 2, kind: output, shape index: {}]
  %s3 = sld [smem:[#allocation0]]
  $region18: #{tpu_custom_call.1} parent=0
    _
  %s5 = ssub.s32 1, %s3
  %s6 = scalar_select 0, %s5, %s3
  %7 = sst [smem:[#allocation3]] %s0
  $region1: #{tpu_custom_call.1} parent=0
    #allocation4 [shape = 'u8[8192]{0}', space=vmem, size = 0x2000, scoped, tag = 'input window, operand 1, single buffered']
    #allocation5 [shape = 's32[1]{0}', space=sflag, size = 0x4, scoped, tag = 'scoped memory for tpu_custom_call.1']
    #allocation6 [shape = 's32[1]{0}', space=sflag, size = 0x4, scoped, tag = 'scoped memory for tpu_custom_call.1']
    #allocation7 [shape = 'u8[8192]{0}', space=vmem, size = 0x2000, scoped, tag = 'output window, operand 0, single buffered']
    %8 = vsyncpa [#allocation5], 0
    %9 = vsyncpa [#allocation6], 0
    // Predicated region
    $region2: #{tpu_custom_call.1} parent=1 // pred_check
      _
    $region3: #{tpu_custom_call.1} parent=1 // pred_check_branch
      %11 = sbr.rel (0) target = $region5
    $region4: #{tpu_custom_call.1} parent=1 // pred_region
      %13 = vsyncadd [#allocation5], 0
      %s15 = sshll.u32 %s1, 4
      %s16 = int_to_ptr.hbm [resolvable:$true] %s15
      %s17 = sshll.u32 [#allocation4], 4
      %s18 = int_to_ptr.vmem [resolvable:$true] %s17
      %20 = dma.hbm_to_vmem [thread:$0]  %s16, 256, %s18, [#allocation5]
    $region5: #{tpu_custom_call.1} parent=1 // pred_fallthru
      _
    // Predicated region
    $region6: #{tpu_custom_call.1} parent=1 // pred_check
      _
    $region7: #{tpu_custom_call.1} parent=1 // pred_check_branch
      %22 = sbr.rel (0) target = $region9
    $region8: #{tpu_custom_call.1} parent=1 // pred_region
      %24 = dma.done [#allocation5], 256
    $region9: #{tpu_custom_call.1} parent=1 // pred_fallthru
      _
    %s25 = sld [smem:[#allocation3]]
    %v26 = vstv %s25
    %v27 = vrcp.pop %v26
    %v28 = vmul.f32 %v26, %v27
    %v29 = vsub.f32 1.0, %v28
    %v30 = vmul.f32 %v27, %v29
    %v31 = vadd.f32 %v27, %v30
    %vm32 = vweird.f32 %v26
    %vm33 = vweird.f32 %v27
    %vm34 = vmor %vm32, %vm33
    %v35 = vsel %vm34, %v27, %v31
    %v36 = vand.u32 2147483647, %v26
    %vm37 = vcmp.eq.f32.partialorder %v36, 8.507059e+37
    %v38 = vand.u32 %v26, 2147483648
    %v39 = vor.u32 1.1754944e-38, %v38
    %v40 = vsel %vm37, %v39, %v35
    %s41 = vtos %v40
    %v42 = vld [vmem:[#allocation4] sm:$0xff]
    %v43 = vld [vmem:[#allocation4 + $0x8] sm:$0xff]
    %v44 = vstv %s41
    %v45 = vpow.f32 %v42, %v44
    %v46 = vpow.f32 %v43, %v44
    %47 = vst [vmem:[#allocation7] sm:$0xff] %v45
    %48 = vst [vmem:[#allocation7 + $0x8] sm:$0xff] %v46
    // Predicated region
    $region10: #{tpu_custom_call.1} parent=1 // pred_check
      _
    $region11: #{tpu_custom_call.1} parent=1 // pred_check_branch
      %50 = sbr.rel (0) target = $region13
    $region12: #{tpu_custom_call.1} parent=1 // pred_region
      %52 = vsyncadd [#allocation6], 0
      %s54 = sshll.u32 [#allocation7], 4
      %s55 = int_to_ptr.vmem [resolvable:$true] %s54
      %s56 = sshll.u32 %s2, 4
      %s57 = int_to_ptr.hbm [resolvable:$true] %s56
      %59 = dma.vmem_to_hbm [thread:$0]  %s55, 256, %s57, [#allocation6]
    $region13: #{tpu_custom_call.1} parent=1 // pred_fallthru
      _
    // Predicated region
    $region14: #{tpu_custom_call.1} parent=1 // pred_check
      _
    $region15: #{tpu_custom_call.1} parent=1 // pred_check_branch
      %61 = sbr.rel (0) target = $region17
    $region16: #{tpu_custom_call.1} parent=1 // pred_region
      %63 = dma.done [#allocation6], 256
    $region17: #{tpu_custom_call.1} parent=1 // pred_fallthru
      _
    %64 = vsyncpa [#allocation5], 1
    %65 = vsyncpa [#allocation6], 1

</llo_original>
